<compile_context>
chip_gen: v5e
topology: v5e:2x2
jax: 0.10.0
libtpu: 0.0.40
codegen_flags: <defaults>
</compile_context>

<pallas_src>
import functools

import jax
import jax.numpy as jnp
from jax import lax
from jax.experimental import pallas as pl
from jax.experimental.pallas import tpu as pltpu


_MAX_TILE_B = 1024  # largest batch tile (>=512 reaches ~85% of HBM roofline)
_MIN_TILE_B = 256   # tile granularity / smallest gridded tile


def _choose_tile_b(B):
    """Batch tile for the gridded path, or None for the grid-less small-batch path.

    Picks the largest tile <= _MAX_TILE_B that still yields >= 2 grid steps so
    v7x's two TensorCores are both used (grid axis is marked "parallel").
    """
    if B < 2 * _MIN_TILE_B:
        return None
    return min(_MAX_TILE_B, (B // 2) // _MIN_TILE_B * _MIN_TILE_B)


def _make_fused_critic_kernel(n_linear_layers: int):
    """Kernel for the twin-fused MLP with `n_linear_layers` linear layers."""
    n_hidden_mats = n_linear_layers - 2  # block-diagonal (2H, 2H) middle layers

    def kernel(state_ref, action_ref, w0s_ref, w0a_ref, *rest):
        hidden_w_refs = rest[:n_hidden_mats]
        w_last_ref, b_ref, b_last_ref, out_ref = rest[n_hidden_mats:]

        b = b_ref[...]  # (n_layers-1, 2H): all ReLU-layer biases, one load

        # Layer 0: h = s @ W0_s + a @ W0_a + b0  (state/action enter separately,
        # so no wrapper-side concat is ever re-added).
        h = (jnp.dot(state_ref[...], w0s_ref[...], preferred_element_type=jnp.float32)
             + jnp.dot(action_ref[...], w0a_ref[...], preferred_element_type=jnp.float32)
             + b[0:1, :])
        h = jnp.maximum(h, 0.0)

        # Hidden layers: block-diagonal (2H, 2H) weights -> both nets in one matmul.
        # TODO(synk): if 2H ever grows past 128, split into two (H, H) dots so the
        # all-zero off-diagonal blocks don't become extra MXU pushes on v5e.
        for j in range(n_hidden_mats):
            h = jnp.dot(h, hidden_w_refs[j][...], preferred_element_type=jnp.float32)
            h = jnp.maximum(h + b[j + 1:j + 2, :], 0.0)

        # Final layer, lane-dense: out[r, i] = sum_k w_last[k, r] * h[i, k]
        # -> (2, TILE_B): q1 row 0, q2 row 1, batch on the lane axis, so the
        # writeback is an unmasked full-width store.
        out = lax.dot_general(w_last_ref[...], h,
                              dimension_numbers=(((0,), (1,)), ((), ())),
                              preferred_element_type=jnp.float32)
        out_ref[...] = (out + b_last_ref[...]).astype(out_ref.dtype)

    return kernel


def init_mlp_params(key, in_dim, out_dim, hidden_size, hidden_layers):
    """Deterministic init mimicking torch.nn.Linear default (U[-1/sqrt(fan_in), ...])."""
    dims = [in_dim] + [hidden_size] * hidden_layers + [out_dim]
    params = []
    for l in range(len(dims) - 1):
        key, kw, kb = jax.random.split(key, 3)
        fan_in = dims[l]
        bound = 1.0 / jnp.sqrt(jnp.float32(fan_in))
        w = jax.random.uniform(kw, (dims[l], dims[l + 1]), jnp.float32, -bound, bound)
        b = jax.random.uniform(kb, (1, dims[l + 1]), jnp.float32, -bound, bound)
        params += [w, b]
    return params


def pack_critic_params(net1_params, net2_params, state_size, n_linear_layers):
    """Pack twin-net params into the fused block-diagonal layout (done once)."""
    H = net1_params[0].shape[1]

    # Layer 0: concat on output axis, split on input axis (state vs action rows).
    w0 = jnp.concatenate([net1_params[0], net2_params[0]], axis=1)   # (in, 2H)
    w0_s = w0[:state_size, :]
    w0_a = w0[state_size:, :]

    # Hidden layers: block-diagonal (2H, 2H); off-diagonal blocks are exactly zero.
    hidden_ws = []
    for l in range(1, n_linear_layers - 1):
        w1, w2 = net1_params[2 * l], net2_params[2 * l]               # (H, H) each
        top = jnp.concatenate([w1, jnp.zeros_like(w1)], axis=1)
        bot = jnp.concatenate([jnp.zeros_like(w2), w2], axis=1)
        hidden_ws.append(jnp.concatenate([top, bot], axis=0))         # (2H, 2H)

    # Last layer: (H, 1) each -> block-diagonal (2H, 2).
    wl1 = net1_params[2 * (n_linear_layers - 1)]
    wl2 = net2_params[2 * (n_linear_layers - 1)]
    w_last = jnp.concatenate([
        jnp.concatenate([wl1, jnp.zeros_like(wl1)], axis=1),
        jnp.concatenate([jnp.zeros_like(wl2), wl2], axis=1)], axis=0)  # (2H, 2)

    # Biases of all ReLU layers in one (n_layers-1, 2H) array -> one DMA.
    rows = [jnp.concatenate([net1_params[2 * l + 1], net2_params[2 * l + 1]], axis=1)
            for l in range(n_linear_layers - 1)]
    biases = jnp.concatenate(rows, axis=0)                             # (n_layers-1, 2H)

    # Final-layer bias in the lane-dense (2, 1) orientation: row0=net1, row1=net2.
    b_last = jnp.concatenate([net1_params[-1], net2_params[-1]], axis=0).reshape(2, 1)

    return (w0_s, w0_a, tuple(hidden_ws), w_last, biases, b_last)


@functools.partial(jax.jit, static_argnames=("n_linear_layers",))
def critic_forward(state, action, packed_params, *, n_linear_layers):
    w0_s, w0_a, hidden_ws, w_last, biases, b_last = packed_params
    B, S = state.shape
    A = action.shape[1]

    kernel = _make_fused_critic_kernel(n_linear_layers)
    weight_inputs = [w0_s, w0_a, *hidden_ws, w_last, biases, b_last]
    tile = _choose_tile_b(B)

    if tile is not None:
        # Pipelined, batch-parallel gridded path for all large batches.
        num_tiles = pl.cdiv(B, tile)
        b_pad = num_tiles * tile
        if b_pad != B:
            # Zero-pad so a non-multiple B still takes the gridded path; padded
            # rows compute harmless junk q's that get sliced off below.
            state = jnp.pad(state, ((0, b_pad - B), (0, 0)))
            action = jnp.pad(action, ((0, b_pad - B), (0, 0)))

        def resident(arr):
            # Constant block index -> weights/biases stay VMEM-resident across tiles.
            nd = arr.ndim
            return pl.BlockSpec(arr.shape, lambda i: (0,) * nd)

        qs = pl.pallas_call(
            kernel,
            grid=(num_tiles,),
            out_shape=jax.ShapeDtypeStruct((2, b_pad), jnp.float32),
            in_specs=[
                pl.BlockSpec((tile, S), lambda i: (i, 0)),
                pl.BlockSpec((tile, A), lambda i: (i, 0)),
                *[resident(w) for w in weight_inputs],
            ],
            out_specs=pl.BlockSpec((2, tile), lambda i: (0, i)),
            compiler_params=pltpu.CompilerParams(
                dimension_semantics=("parallel",)),
        )(state, action, *weight_inputs)
        # NOTE: (1024, S+A) f32 double-buffered is <1 MiB -> far under VMEM
        # limits on v5e/v6e/v7x; bf16 inputs would halve DMA further if the
        # looser tolerance is acceptable.
    else:
        # Small batch (< 2 * _MIN_TILE_B rows): grid-less whole-array path.
        # The size cap keeps total VMEM tiny on every generation (incl. v7x 64 MiB).
        vmem = pl.BlockSpec(memory_space=pltpu.MemorySpace.VMEM)
        qs = pl.pallas_call(
            kernel,
            out_shape=jax.ShapeDtypeStruct((2, B), jnp.float32),
            in_specs=[vmem] * (2 + len(weight_inputs)),
            out_specs=vmem,
        )(state, action, *weight_inputs)

    return qs[0, :B].reshape(B, 1), qs[1, :B].reshape(B, 1)


def reference_forward(state, action, net1_params, net2_params, n_linear_layers):
    x = jnp.concatenate([state, action], axis=1)

    def mlp(h, params):
        for l in range(n_linear_layers):
            w, b = params[2 * l], params[2 * l + 1]
            h = h @ w + b
            if l < n_linear_layers - 1:
                h = jnp.maximum(h, 0.0)
        return h

    return mlp(x, net1_params), mlp(x, net2_params)


if __name__ == "__main__":
    cfg = {"state_size": 24, "act_size": 8, "hidden_size": 32, "hidden_layers": 2}
    n_linear_layers = cfg["hidden_layers"] + 1
    in_dim = cfg["state_size"] + cfg["act_size"]

    key = jax.random.PRNGKey(0)
    k_s1, k_a1, k_s2, k_a2, k_s3, k_a3, k_net1, k_net2 = jax.random.split(key, 8)

    net1_params = init_mlp_params(k_net1, in_dim, 1, cfg["hidden_size"], cfg["hidden_layers"])
    net2_params = init_mlp_params(k_net2, in_dim, 1, cfg["hidden_size"], cfg["hidden_layers"])
    packed = pack_critic_params(net1_params, net2_params, cfg["state_size"], n_linear_layers)

    # --- small batch: grid-less path ---
    state_s = jax.random.normal(k_s1, (8, cfg["state_size"]), jnp.float32)
    action_s = jax.random.normal(k_a1, (8, cfg["act_size"]), jnp.float32)
    q1, q2 = critic_forward(state_s, action_s, packed, n_linear_layers=n_linear_layers)
    jax.block_until_ready((q1, q2))
    r1, r2 = reference_forward(state_s, action_s, net1_params, net2_params, n_linear_layers)
    assert q1.shape == (8, 1) and q2.shape == (8, 1)
    assert jnp.allclose(q1, r1, atol=1e-4) and jnp.allclose(q2, r2, atol=1e-4)

    # --- training-sized batch, exact tile multiple: gridded path (2 parallel steps) ---
    state_l = jax.random.normal(k_s2, (512, cfg["state_size"]), jnp.float32)
    action_l = jax.random.normal(k_a2, (512, cfg["act_size"]), jnp.float32)
    q1l, q2l = critic_forward(state_l, action_l, packed, n_linear_layers=n_linear_layers)
    jax.block_until_ready((q1l, q2l))
    r1l, r2l = reference_forward(state_l, action_l, net1_params, net2_params, n_linear_layers)
    assert q1l.shape == (512, 1) and q2l.shape == (512, 1)
    assert jnp.allclose(q1l, r1l, atol=1e-4) and jnp.allclose(q2l, r2l, atol=1e-4)

    # --- non-multiple batch: gridded path via zero-padding (cdiv grid) ---
    state_p = jax.random.normal(k_s3, (1000, cfg["state_size"]), jnp.float32)
    action_p = jax.random.normal(k_a3, (1000, cfg["act_size"]), jnp.float32)
    q1p, q2p = critic_forward(state_p, action_p, packed, n_linear_layers=n_linear_layers)
    jax.block_until_ready((q1p, q2p))
    r1p, r2p = reference_forward(state_p, action_p, net1_params, net2_params, n_linear_layers)
    assert q1p.shape == (1000, 1) and q2p.shape == (1000, 1)
    assert jnp.allclose(q1p, r1p, atol=1e-4) and jnp.allclose(q2p, r2p, atol=1e-4)

    print("KERNEL_OK")
</pallas_src>

<mosaic_0001>
module attributes {stable_mosaic.version = 11 : i64} {
  func.func @kernel(%arg0: memref<8x24xf32, #tpu.memory_space<vmem>>, %arg1: memref<8x8xf32, #tpu.memory_space<vmem>>, %arg2: memref<24x64xf32, #tpu.memory_space<vmem>>, %arg3: memref<8x64xf32, #tpu.memory_space<vmem>>, %arg4: memref<64x64xf32, #tpu.memory_space<vmem>>, %arg5: memref<64x2xf32, #tpu.memory_space<vmem>>, %arg6: memref<2x64xf32, #tpu.memory_space<vmem>>, %arg7: memref<2x1xf32, #tpu.memory_space<vmem>>, %arg8: memref<2x8xf32, #tpu.memory_space<vmem>>) attributes {dimension_semantics = [], scalar_prefetch = 0 : i64, scratch_operands = 0 : i64, tpu.core_type = #tpu.core_type<tc>} {
    %c0 = arith.constant 0 : index
    %c0_0 = arith.constant 0 : index
    %0 = vector.load %arg6[%c0, %c0_0] : memref<2x64xf32, #tpu.memory_space<vmem>>, vector<2x64xf32>
    %c0_1 = arith.constant 0 : index
    %c0_2 = arith.constant 0 : index
    %1 = vector.load %arg0[%c0_1, %c0_2] : memref<8x24xf32, #tpu.memory_space<vmem>>, vector<8x24xf32>
    %c0_3 = arith.constant 0 : index
    %c0_4 = arith.constant 0 : index
    %2 = vector.load %arg2[%c0_3, %c0_4] : memref<24x64xf32, #tpu.memory_space<vmem>>, vector<24x64xf32>
    %cst = arith.constant dense<0.000000e+00> : vector<8x64xf32>
    %3 = tpu.matmul %1, %2, %cst {dimension_numbers = #tpu.dot_dimension_numbers<[1], [0], [0], [1], [0, 0, 1, 1], [], []>} : vector<8x24xf32>, vector<24x64xf32>, vector<8x64xf32> -> vector<8x64xf32>
    %c0_5 = arith.constant 0 : index
    %c0_6 = arith.constant 0 : index
    %4 = vector.load %arg1[%c0_5, %c0_6] : memref<8x8xf32, #tpu.memory_space<vmem>>, vector<8x8xf32>
    %c0_7 = arith.constant 0 : index
    %c0_8 = arith.constant 0 : index
    %5 = vector.load %arg3[%c0_7, %c0_8] : memref<8x64xf32, #tpu.memory_space<vmem>>, vector<8x64xf32>
    %cst_9 = arith.constant dense<0.000000e+00> : vector<8x64xf32>
    %6 = tpu.matmul %4, %5, %cst_9 {dimension_numbers = #tpu.dot_dimension_numbers<[1], [0], [0], [1], [0, 0, 1, 1], [], []>} : vector<8x8xf32>, vector<8x64xf32>, vector<8x64xf32> -> vector<8x64xf32>
    %7 = arith.addf %3, %6 : vector<8x64xf32>
    %8 = vector.extract_strided_slice %0 {offsets = [0, 0], sizes = [1, 64], strides = [1, 1]} : vector<2x64xf32> to vector<1x64xf32>
    %9 = vector.broadcast %8 : vector<1x64xf32> to vector<8x64xf32>
    %10 = arith.addf %7, %9 : vector<8x64xf32>
    %cst_10 = arith.constant 0.000000e+00 : f32
    %11 = vector.broadcast %cst_10 : f32 to vector<8x64xf32>
    %12 = arith.maximumf %10, %11 : vector<8x64xf32>
    %c0_11 = arith.constant 0 : index
    %c0_12 = arith.constant 0 : index
    %13 = vector.load %arg4[%c0_11, %c0_12] : memref<64x64xf32, #tpu.memory_space<vmem>>, vector<64x64xf32>
    %cst_13 = arith.constant dense<0.000000e+00> : vector<8x64xf32>
    %14 = tpu.matmul %12, %13, %cst_13 {dimension_numbers = #tpu.dot_dimension_numbers<[1], [0], [0], [1], [0, 0, 1, 1], [], []>} : vector<8x64xf32>, vector<64x64xf32>, vector<8x64xf32> -> vector<8x64xf32>
    %15 = vector.extract_strided_slice %0 {offsets = [1, 0], sizes = [1, 64], strides = [1, 1]} : vector<2x64xf32> to vector<1x64xf32>
    %16 = vector.broadcast %15 : vector<1x64xf32> to vector<8x64xf32>
    %17 = arith.addf %14, %16 : vector<8x64xf32>
    %cst_14 = arith.constant 0.000000e+00 : f32
    %18 = vector.broadcast %cst_14 : f32 to vector<8x64xf32>
    %19 = arith.maximumf %17, %18 : vector<8x64xf32>
    %c0_15 = arith.constant 0 : index
    %c0_16 = arith.constant 0 : index
    %20 = vector.load %arg5[%c0_15, %c0_16] : memref<64x2xf32, #tpu.memory_space<vmem>>, vector<64x2xf32>
    %cst_17 = arith.constant dense<0.000000e+00> : vector<2x8xf32>
    %21 = tpu.matmul %20, %19, %cst_17 {dimension_numbers = #tpu.dot_dimension_numbers<[0], [1], [1], [0], [0, 1, 1, 0], [], []>} : vector<64x2xf32>, vector<8x64xf32>, vector<2x8xf32> -> vector<2x8xf32>
    %c0_18 = arith.constant 0 : index
    %c0_19 = arith.constant 0 : index
    %22 = vector.load %arg7[%c0_18, %c0_19] : memref<2x1xf32, #tpu.memory_space<vmem>>, vector<2x1xf32>
    %23 = vector.broadcast %22 : vector<2x1xf32> to vector<2x8xf32>
    %24 = arith.addf %21, %23 : vector<2x8xf32>
    %c0_20 = arith.constant 0 : index
    %c0_21 = arith.constant 0 : index
    %25 = vector.load %arg8[%c0_20, %c0_21] : memref<2x8xf32, #tpu.memory_space<vmem>>, vector<2x8xf32>
    tpu.vector_store %arg8[%c0_20, %c0_21], %24 {strides = array<i32>} : memref<2x8xf32, #tpu.memory_space<vmem>>, vector<2x8xf32>,
    return
  }
}

</mosaic_0001>

<llo_original>
// kernel: critic_forward.1
$region0: #{critic_forward.1}
  #allocation0 [shape = 'u32[]', space=smem, size = 0x4, offset = 0x4, fixed_abs, tag = 'smem constant byte address 0x4 - core index']
  #allocation1 [shape = 'u32[72,128]{1,0:T(1,128)}', space=vmem, size = 0x9000, scoped, tag = 'internal scratch']
  %s0 = inlined_call_operand.hbm [shape: f32[8,24], index: 0, kind: input, shape index: {}]
  %s1 = inlined_call_operand.hbm [shape: f32[8,8], index: 1, kind: input, shape index: {}]
  %s2 = inlined_call_operand.hbm [shape: f32[24,64], index: 2, kind: input, shape index: {}]
  %s3 = inlined_call_operand.hbm [shape: f32[8,64], index: 3, kind: input, shape index: {}]
  %s4 = inlined_call_operand.vmem [shape: f32[64,64], index: 4, kind: input, shape index: {}]
  %s5 = inlined_call_operand.vmem [shape: f32[64,2], index: 5, kind: input, shape index: {}]
  %s6 = inlined_call_operand.vmem [shape: f32[2,64], index: 6, kind: input, shape index: {}]
  %s7 = inlined_call_operand.vmem [shape: f32[2,1], index: 7, kind: input, shape index: {}]
  %s8 = inlined_call_operand.vmem [shape: f32[2,8], index: 8, kind: output, shape index: {}]
  %s9 = sld [smem:[#allocation0]]
  $region58: #{critic_forward.1} parent=0
    _
  %s11 = ssub.s32 1, %s9
  %s12 = scalar_select 0, %s11, %s9
  $region1: #{critic_forward.1} parent=0
    #allocation2 [shape = 'u8[4096]{0}', space=vmem, size = 0x1000, scoped, tag = 'input window, operand 0, single buffered']
    #allocation3 [shape = 's32[1]{0}', space=sflag, size = 0x4, scoped, tag = 'scoped memory for critic_forward.1']
    #allocation4 [shape = 'u8[4096]{0}', space=vmem, size = 0x1000, scoped, tag = 'input window, operand 1, single buffered']
    #allocation5 [shape = 's32[1]{0}', space=sflag, size = 0x4, scoped, tag = 'scoped memory for critic_forward.1']
    #allocation6 [shape = 'u8[12288]{0}', space=vmem, size = 0x3000, scoped, tag = 'input window, operand 2, single buffered']
    #allocation7 [shape = 'u8[4096]{0}', space=vmem, size = 0x1000, scoped, tag = 'input window, operand 3, single buffered']
    #allocation8 [shape = 's32[1]{0}', space=sflag, size = 0x4, scoped, tag = 'scoped memory for critic_forward.1']
    %13 = vsyncpa [#allocation3], 0
    %14 = vsyncpa [#allocation5], 0
    %15 = vsyncpa [#allocation8], 0
    // Predicated region
    $region2: #{critic_forward.1} parent=1 // pred_check
      _
    $region3: #{critic_forward.1} parent=1 // pred_check_branch
      %17 = sbr.rel (0) target = $region5
    $region4: #{critic_forward.1} parent=1 // pred_region
      %19 = vsyncadd [#allocation3], 0
      %s21 = sshll.u32 %s0, 4
      %s22 = int_to_ptr.hbm [resolvable:$true] %s21
      %s23 = sshll.u32 [#allocation2], 4
      %s24 = int_to_ptr.vmem [resolvable:$true] %s23
      %26 = dma.hbm_to_vmem [thread:$0]  %s22, 128, %s24, [#allocation3]
    $region5: #{critic_forward.1} parent=1 // pred_fallthru
      _
    // Predicated region
    $region6: #{critic_forward.1} parent=1 // pred_check
      _
    $region7: #{critic_forward.1} parent=1 // pred_check_branch
      %28 = sbr.rel (0) target = $region9
    $region8: #{critic_forward.1} parent=1 // pred_region
      %30 = vsyncadd [#allocation5], 0
      %s32 = sshll.u32 %s1, 4
      %s33 = int_to_ptr.hbm [resolvable:$true] %s32
      %s34 = sshll.u32 [#allocation4], 4
      %s35 = int_to_ptr.vmem [resolvable:$true] %s34
      %37 = dma.hbm_to_vmem [thread:$0]  %s33, 128, %s35, [#allocation5]
    $region9: #{critic_forward.1} parent=1 // pred_fallthru
      _
    // Predicated region
    $region10: #{critic_forward.1} parent=1 // pred_check
      _
    $region11: #{critic_forward.1} parent=1 // pred_check_branch
      %39 = sbr.rel (0) target = $region13
    $region12: #{critic_forward.1} parent=1 // pred_region
      %41 = vsyncadd [#allocation5], 0
      %s42 = sshll.u32 %s2, 4
      %s43 = int_to_ptr.hbm [resolvable:$true] %s42
      %s44 = sshll.u32 [#allocation6], 4
      %s45 = int_to_ptr.vmem [resolvable:$true] %s44
      %50 = dma.hbm_to_vmem [thread:$0]  %s43, 384, %s45, [#allocation5], 128, 128, 8
    $region13: #{critic_forward.1} parent=1 // pred_fallthru
      _
    // Predicated region
    $region14: #{critic_forward.1} parent=1 // pred_check
      _
    $region15: #{critic_forward.1} parent=1 // pred_check_branch
      %52 = sbr.rel (0) target = $region17
    $region16: #{critic_forward.1} parent=1 // pred_region
      %54 = vsyncadd [#allocation8], 0
      %s56 = sshll.u32 %s3, 4
      %s57 = int_to_ptr.hbm [resolvable:$true] %s56
      %s58 = sshll.u32 [#allocation7], 4
      %s59 = int_to_ptr.vmem [resolvable:$true] %s58
      %61 = dma.hbm_to_vmem [thread:$0]  %s57, 128, %s59, [#allocation8]
    $region17: #{critic_forward.1} parent=1 // pred_fallthru
      _
    // Predicated region
    $region18: #{critic_forward.1} parent=1 // pred_check
      _
    $region19: #{critic_forward.1} parent=1 // pred_check_branch
      %63 = sbr.rel (0) target = $region21
    $region20: #{critic_forward.1} parent=1 // pred_region
      _
    $region21: #{critic_forward.1} parent=1 // pred_fallthru
      _
    // Predicated region
    $region22: #{critic_forward.1} parent=1 // pred_check
      _
    $region23: #{critic_forward.1} parent=1 // pred_check_branch
      %65 = sbr.rel (0) target = $region25
    $region24: #{critic_forward.1} parent=1 // pred_region
      _
    $region25: #{critic_forward.1} parent=1 // pred_fallthru
      _
    // Predicated region
    $region26: #{critic_forward.1} parent=1 // pred_check
      _
    $region27: #{critic_forward.1} parent=1 // pred_check_branch
      %67 = sbr.rel (0) target = $region29
    $region28: #{critic_forward.1} parent=1 // pred_region
      _
    $region29: #{critic_forward.1} parent=1 // pred_fallthru
      _
    // Predicated region
    $region30: #{critic_forward.1} parent=1 // pred_check
      _
    $region31: #{critic_forward.1} parent=1 // pred_check_branch
      %69 = sbr.rel (0) target = $region33
    $region32: #{critic_forward.1} parent=1 // pred_region
      _
    $region33: #{critic_forward.1} parent=1 // pred_fallthru
      _
    // Predicated region
    $region34: #{critic_forward.1} parent=1 // pred_check
      _
    $region35: #{critic_forward.1} parent=1 // pred_check_branch
      %71 = sbr.rel (0) target = $region37
    $region36: #{critic_forward.1} parent=1 // pred_region
      %73 = dma.done [#allocation3], 128
    $region37: #{critic_forward.1} parent=1 // pred_fallthru
      _
    // Predicated region
    $region38: #{critic_forward.1} parent=1 // pred_check
      _
    $region39: #{critic_forward.1} parent=1 // pred_check_branch
      %75 = sbr.rel (0) target = $region41
    $region40: #{critic_forward.1} parent=1 // pred_region
      %77 = dma.done [#allocation5], 128
    $region41: #{critic_forward.1} parent=1 // pred_fallthru
      _
    // Predicated region
    $region42: #{critic_forward.1} parent=1 // pred_check
      _
    $region43: #{critic_forward.1} parent=1 // pred_check_branch
      %79 = sbr.rel (0) target = $region45
    $region44: #{critic_forward.1} parent=1 // pred_region
      %81 = dma.done [#allocation5], 384
    $region45: #{critic_forward.1} parent=1 // pred_fallthru
      _
    // Predicated region
    $region46: #{critic_forward.1} parent=1 // pred_check
      _
    $region47: #{critic_forward.1} parent=1 // pred_check_branch
      %83 = sbr.rel (0) target = $region49
    $region48: #{critic_forward.1} parent=1 // pred_region
      %85 = dma.done [#allocation8], 128
    $region49: #{critic_forward.1} parent=1 // pred_fallthru
      _
    %v86 = vld [vmem:[%s6] sm:$0x3]
    %v87 = vld [vmem:[#allocation2] sm:$0xff]
    %v88 = vld [vmem:[#allocation6] sm:$0xff]
    %v89 = vld [vmem:[#allocation6 + $0x8] sm:$0xff]
    %v90 = vld [vmem:[#allocation6 + $0x10] sm:$0xff]
    %v91 = vld [vmem:[#allocation4] sm:$0xff]
    %v92 = vld [vmem:[#allocation7] sm:$0xff]
    %vm93 = vcmask 64512
    %v95 = vsel %vm93, %v91, 0
    %97 = vmatpush.msra.mxu0 0.0
    %98 = vmatpush.msra.mxu0 0.0
    %99 = vmatpush.msra.mxu0 0.0
    %100 = vmatpush.msra.mxu0 0.0
    %101 = vmatpush.msra.mxu0 0.0
    %102 = vmatpush.msra.mxu0 0.0
    %103 = vmatpush.msra.mxu0 0.0
    %104 = vmatpush.msra.mxu0 0.0
    %105 = vmatpush.msra.mxu0 0.0
    %106 = vmatpush.msra.mxu0 0.0
    %107 = vmatpush.msra.mxu0 0.0
    %108 = vmatpush.msra.mxu0 0.0
    %109 = vmatpush.msra.mxu0 0.0
    %110 = vmatpush.msra.mxu0 0.0
    %111 = vmatpush.msra.mxu0 0.0
    %112 = vmatpush.msra.mxu0 %v92
    %113 = vmatmul.f32.gmra.mxu0 %v95
    %v114 = vpop.f32.mrf.mxu0
    %v115 = vadd.f32 0.0, %v114
    %116 = vdwg.mxu0
    %vm117 = vcmask 195584
    %v119 = vsel %vm117, %v87, 0
    %121 = vmatpush.msra.mxu0 0.0
    %122 = vmatpush.msra.mxu0 0.0
    %123 = vmatpush.msra.mxu0 0.0
    %124 = vmatpush.msra.mxu0 0.0
    %125 = vmatpush.msra.mxu0 0.0
    %126 = vmatpush.msra.mxu0 0.0
    %127 = vmatpush.msra.mxu0 0.0
    %128 = vmatpush.msra.mxu0 0.0
    %129 = vmatpush.msra.mxu0 0.0
    %130 = vmatpush.msra.mxu0 0.0
    %131 = vmatpush.msra.mxu0 0.0
    %132 = vmatpush.msra.mxu0 0.0
    %133 = vmatpush.msra.mxu0 0.0
    %134 = vmatpush.msra.mxu0 %v90
    %135 = vmatpush.msra.mxu0 %v89
    %136 = vmatpush.msra.mxu0 %v88
    %137 = vmatmul.f32.gmra.mxu0 %v119
    %v138 = vpop.f32.mrf.mxu0
    %v139 = vadd.f32 %v115, %v138
    %140 = vdwg.mxu0
    %v141 = vperm.slane %v86, 0
    %v142 = vadd.f32 %v139, %v141
    %v143 = vmax.f32 %v142, 0.0
    %v144 = vld [vmem:[%s4] sm:$0xff]
    %v145 = vld [vmem:[%s4 + $0x8] sm:$0xff]
    %v146 = vld [vmem:[%s4 + $0x10] sm:$0xff]
    %v147 = vld [vmem:[%s4 + $0x18] sm:$0xff]
    %v148 = vld [vmem:[%s4 + $0x20] sm:$0xff]
    %v149 = vld [vmem:[%s4 + $0x28] sm:$0xff]
    %v150 = vld [vmem:[%s4 + $0x30] sm:$0xff]
    %v151 = vld [vmem:[%s4 + $0x38] sm:$0xff]
    %v152 = vperm.slane %v86, 1
    %vm153 = vcmask 523264
    %v155 = vsel %vm153, %v143, 0
    %157 = vmatpush.msra.mxu0 0.0
    %158 = vmatpush.msra.mxu0 0.0
    %159 = vmatpush.msra.mxu0 0.0
    %160 = vmatpush.msra.mxu0 0.0
    %161 = vmatpush.msra.mxu0 0.0
    %162 = vmatpush.msra.mxu0 0.0
    %163 = vmatpush.msra.mxu0 0.0
    %164 = vmatpush.msra.mxu0 0.0
    %165 = vmatpush.msra.mxu0 %v151
    %166 = vmatpush.msra.mxu0 %v150
    %167 = vmatpush.msra.mxu0 %v149
    %168 = vmatpush.msra.mxu0 %v148
    %169 = vmatpush.msra.mxu0 %v147
    %170 = vmatpush.msra.mxu0 %v146
    %171 = vmatpush.msra.mxu0 %v145
    %172 = vmatpush.msra.mxu0 %v144
    %173 = vmatmul.f32.gmra.mxu0 %v155
    %v174 = vpop.f32.mrf.mxu0
    %v175 = vadd.f32 %v152, %v174
    %176 = vdwg.mxu0
    %v177 = vmax.f32 %v175, 0.0
    %v178 = vld [vmem:[%s5] sm:$0xff]
    %v179 = vld [vmem:[%s5 + $0x8] sm:$0xff]
    %v180 = vld [vmem:[%s5 + $0x10] sm:$0xff]
    %v181 = vld [vmem:[%s5 + $0x18] sm:$0xff]
    %v182 = vld [vmem:[%s5 + $0x20] sm:$0xff]
    %v183 = vld [vmem:[%s5 + $0x28] sm:$0xff]
    %v184 = vld [vmem:[%s5 + $0x30] sm:$0xff]
    %v185 = vld [vmem:[%s5 + $0x38] sm:$0xff]
    %v186 = vld [vmem:[%s7] sm:$0x3]
    %188 = vset.pattern.permute.xlu0 0
    %189 = vperm.xlu0 %188, %v186
    %v190 = vpop.permute.xlu0 %189
    %192 = vxpose.xlu0.b32.start [1/16] %v178, 128
    %193 = vxpose.xlu0.b32.cont [2/16] %v179, 128
    %194 = vxpose.xlu0.b32.cont [3/16] %v180, 128
    %195 = vxpose.xlu0.b32.cont [4/16] %v181, 128
    %196 = vxpose.xlu0.b32.cont [5/16] %v182, 128
    %197 = vxpose.xlu0.b32.cont [6/16] %v183, 128
    %198 = vxpose.xlu0.b32.cont [7/16] %v184, 128
    %199 = vxpose.xlu0.b32.cont [8/16] %v185, 128
    %200 = vxpose.xlu0.b32.cont [9/16] 0.0, 128
    %201 = vxpose.xlu0.b32.cont [10/16] 0.0, 128
    %202 = vxpose.xlu0.b32.cont [11/16] 0.0, 128
    %203 = vxpose.xlu0.b32.cont [12/16] 0.0, 128
    %204 = vxpose.xlu0.b32.cont [13/16] 0.0, 128
    %205 = vxpose.xlu0.b32.cont [14/16] 0.0, 128
    %206 = vxpose.xlu0.b32.cont [15/16] 0.0, 128
    %207 = vxpose.xlu0.b32.end [16/16] 0.0, 128
    %v208 = vpop.trf.xlu0
    %v209 = vpop.trf.xlu0
    %v210 = vpop.trf.xlu0
    %v211 = vpop.trf.xlu0
    %v212 = vpop.trf.xlu0
    %v213 = vpop.trf.xlu0
    %v214 = vpop.trf.xlu0
    %v215 = vpop.trf.xlu0
    %v216 = vpop.trf.xlu0
    %v217 = vpop.trf.xlu0
    %v218 = vpop.trf.xlu0
    %v219 = vpop.trf.xlu0
    %v220 = vpop.trf.xlu0
    %v221 = vpop.trf.xlu0
    %v222 = vpop.trf.xlu0
    %v223 = vpop.trf.xlu0
    %v225 = vsel %vm153, %v208, 0
    %v228 = vsel %vm153, %v177, 0
    %230 = vmatpush.xpose.msra.mxu0 0.0
    %231 = vmatpush.xpose.msra.mxu0 0.0
    %232 = vmatpush.xpose.msra.mxu0 0.0
    %233 = vmatpush.xpose.msra.mxu0 0.0
    %234 = vmatpush.xpose.msra.mxu0 0.0
    %235 = vmatpush.xpose.msra.mxu0 0.0
    %236 = vmatpush.xpose.msra.mxu0 0.0
    %237 = vmatpush.xpose.msra.mxu0 0.0
    %238 = vmatpush.xpose.msra.mxu0 0.0
    %239 = vmatpush.xpose.msra.mxu0 0.0
    %240 = vmatpush.xpose.msra.mxu0 0.0
    %241 = vmatpush.xpose.msra.mxu0 0.0
    %242 = vmatpush.xpose.msra.mxu0 0.0
    %243 = vmatpush.xpose.msra.mxu0 0.0
    %244 = vmatpush.xpose.msra.mxu0 0.0
    %245 = vmatpush.xpose.msra.mxu0 %v228
    %246 = vmatmul.f32.gmra.mxu0 %v225
    %v247 = vpop.f32.mrf.mxu0
    %v248 = vadd.f32 %v190, %v247
    %249 = vdwg.mxu0
    %vm250 = vcmask 58368
    %251 = vst.msk [vmem:[%s8] sm:$0x3] %vm250, %v248
    // Predicated region
    $region50: #{critic_forward.1} parent=1 // pred_check
      _
    $region51: #{critic_forward.1} parent=1 // pred_check_branch
      %253 = sbr.rel (0) target = $region53
    $region52: #{critic_forward.1} parent=1 // pred_region
      _
    $region53: #{critic_forward.1} parent=1 // pred_fallthru
      _
    // Predicated region
    $region54: #{critic_forward.1} parent=1 // pred_check
      _
    $region55: #{critic_forward.1} parent=1 // pred_check_branch
      %255 = sbr.rel (0) target = $region57
    $region56: #{critic_forward.1} parent=1 // pred_region
      _
    $region57: #{critic_forward.1} parent=1 // pred_fallthru
      _
    %256 = vsyncpa [#allocation3], 1
    %257 = vsyncpa [#allocation5], 1
    %258 = vsyncpa [#allocation8], 1

</llo_original>
